<compile_context>
chip_gen: v7x
topology: tpu7x:2x2x1
jax: 0.10.0
libtpu: 0.0.40
codegen_flags: <defaults>
</compile_context>

<pallas_src>
import functools
import numpy as np
import jax
import jax.numpy as jnp
from jax.experimental import pallas as pl
from jax.experimental.pallas import tpu as pltpu

# ----------------------- synthetic FLAME dimensions -----------------------
V = 64            # number of mesh vertices
F = 48            # number of faces
J = 5             # joints: global, neck, jaw, eye_l, eye_r
N_SHAPE = 10      # shape params
N_EXPR = 5        # expression params
K = N_SHAPE + N_EXPR
P = 9 * (J - 1)   # pose blendshape basis size = 36
L_STATIC = 8      # static landmarks
L_DYN = 4         # dynamic (contour) landmarks
L2 = L_DYN + L_STATIC
L_FULL = 12       # "full" 3d landmarks
PARENTS = [-1, 0, 1, 1, 1]
DTYPE = jnp.float32

VP = ((V + 127) // 128) * 128      # lane-padded vertex count (128)
M3 = 3 * VP                        # flat coord-major width (384, lane-dense)
KP = K + P                         # fused blendshape basis rows (51)


def _neck_chain():
    chain, cur = [], 1
    while cur != -1:
        chain.append(cur)
        cur = PARENTS[cur]
    return tuple(chain)


NECK_CHAIN = _neck_chain()         # (1, 0)


# ============================ Pallas kernel ============================

def _flame_kernel(bp_ref, dirs_ref, tmpl_ref, A_ref, w_ref, s2t_ref, s3t_ref,
                  out_ref, lmk2_ref, lmk3_ref):
    # bp_ref  : (B, K+P)        concat(betas, pose_feature)
    # dirs_ref: (K+P, 3*VP)     concat(shape basis, pose basis), coord-major
    # tmpl_ref: (1, 3*VP)       coord-major template
    # A_ref   : (4*B*3, J)      relative transforms, row = k*3B + b*3 + c
    # w_ref   : (J, VP)         LBS weights, transposed + lane padded
    # s2t_ref : (B, VP, L2)     per-batch barycentric selection (2d landmarks)
    # s3t_ref : (VP, L_FULL)    barycentric selection (3d landmarks)
    # out_ref : (B*3, VP)       posed vertices, row = b*3 + c
    # lmk2_ref: (B*3, L2)
    # lmk3_ref: (B*3, L_FULL)
    Bn = bp_ref.shape[0]
    Vp = w_ref.shape[1]
    B3 = 3 * Bn

    # fused shape + pose blendshapes: one lane-dense matmul over all coords
    vp = tmpl_ref[...] + jnp.dot(bp_ref[...], dirs_ref[...],
                                 preferred_element_type=jnp.float32)      # (B, 3*Vp)

    # per-vertex blended transforms: all batches / coords / homogeneous terms
    # in a single matmul
    T = jnp.dot(A_ref[...], w_ref[...],
                preferred_element_type=jnp.float32)                       # (4*B*3, Vp)

    s3t = s3t_ref[...]                                                    # (Vp, L_FULL)

    outs, l2s, l3s = [], [], []
    for b in range(Bn):                       # B is tiny & static -> unrolled
        r = 3 * b
        vx = vp[b:b + 1, 0 * Vp:1 * Vp]       # (1, Vp), broadcasts over 3 rows
        vy = vp[b:b + 1, 1 * Vp:2 * Vp]
        vz = vp[b:b + 1, 2 * Vp:3 * Vp]
        ob = (T[0 * B3 + r:0 * B3 + r + 3, :] * vx
              + T[1 * B3 + r:1 * B3 + r + 3, :] * vy
              + T[2 * B3 + r:2 * B3 + r + 3, :] * vz
              + T[3 * B3 + r:3 * B3 + r + 3, :])                          # (3, Vp)
        outs.append(ob)
        # barycentric landmarks: tiny MXU matmuls on VMEM-resident vertices
        l2s.append(jnp.dot(ob, s2t_ref[b], preferred_element_type=jnp.float32))
        l3s.append(jnp.dot(ob, s3t, preferred_element_type=jnp.float32))

    out_ref[...] = jnp.concatenate(outs, axis=0)      # single (B*3, VP) store
    lmk2_ref[...] = jnp.concatenate(l2s, axis=0)
    lmk3_ref[...] = jnp.concatenate(l3s, axis=0)


def flame_pallas(bp, dirs_all, v_template_cm, A_lbs, lbs_weights_cm, s2t, s3t):
    B = bp.shape[0]
    return pl.pallas_call(
        _flame_kernel,
        out_shape=(jax.ShapeDtypeStruct((B * 3, VP), DTYPE),
                   jax.ShapeDtypeStruct((B * 3, L2), DTYPE),
                   jax.ShapeDtypeStruct((B * 3, L_FULL), DTYPE)),
        grid=(1,),
        in_specs=[pl.BlockSpec((B, KP), lambda i: (0, 0)),
                  pl.BlockSpec((KP, M3), lambda i: (0, 0)),
                  pl.BlockSpec((1, M3), lambda i: (0, 0)),
                  pl.BlockSpec((4 * B * 3, J), lambda i: (0, 0)),
                  pl.BlockSpec((J, VP), lambda i: (0, 0)),
                  pl.BlockSpec((B, VP, L2), lambda i: (0, 0, 0)),
                  pl.BlockSpec((VP, L_FULL), lambda i: (0, 0))],
        out_specs=(pl.BlockSpec((B * 3, VP), lambda i: (0, 0)),
                   pl.BlockSpec((B * 3, L2), lambda i: (0, 0)),
                   pl.BlockSpec((B * 3, L_FULL), lambda i: (0, 0))),
        compiler_params=pltpu.CompilerParams(dimension_semantics=("arbitrary",)),
    )(bp, dirs_all, v_template_cm, A_lbs, lbs_weights_cm, s2t, s3t)


# ============================ plain-JAX glue ============================

def batch_rodrigues(rot_vecs, eps=1e-8):
    N = rot_vecs.shape[0]
    angle = jnp.sqrt(jnp.sum((rot_vecs + eps) ** 2, axis=1, keepdims=True))  # (N,1)
    rot_dir = rot_vecs / angle
    cos = jnp.cos(angle)[:, None, :]
    sin = jnp.sin(angle)[:, None, :]
    rx, ry, rz = rot_dir[:, 0:1], rot_dir[:, 1:2], rot_dir[:, 2:3]
    zeros = jnp.zeros_like(rx)
    Kmat = jnp.concatenate([zeros, -rz, ry, rz, zeros, -rx, -ry, rx, zeros],
                           axis=1).reshape(N, 3, 3)
    ident = jnp.eye(3, dtype=rot_vecs.dtype)[None]
    return ident + sin * Kmat + (1.0 - cos) * jnp.matmul(Kmat, Kmat)


def batch_rigid_transform(rot_mats, joints, parents):
    B, Jn = joints.shape[:2]
    joints_e = joints[..., None]                                    # (B,J,3,1)
    rel_joints = joints_e.at[:, 1:].add(-joints_e[:, parents[1:]])
    tm_top = jnp.concatenate([rot_mats, rel_joints], axis=-1)       # (B,J,3,4)
    bottom = jnp.broadcast_to(
        jnp.array([0.0, 0.0, 0.0, 1.0], DTYPE).reshape(1, 1, 1, 4), (B, Jn, 1, 4))
    transforms_mat = jnp.concatenate([tm_top, bottom], axis=2)      # (B,J,4,4)
    chain = [transforms_mat[:, 0]]
    for i in range(1, Jn):
        chain.append(jnp.matmul(chain[parents[i]], transforms_mat[:, i]))
    transforms = jnp.stack(chain, axis=1)
    posed_joints = transforms[:, :, :3, 3]
    joints_h = jnp.concatenate([joints_e, jnp.zeros((B, Jn, 1, 1), DTYPE)], axis=2)
    tj = jnp.matmul(transforms, joints_h)                           # (B,J,4,1)
    rel_transforms = transforms - jnp.pad(tj, ((0, 0), (0, 0), (0, 0), (3, 0)))
    return posed_joints, rel_transforms


def rot_mat_to_euler(rot_mats):
    sy = jnp.sqrt(rot_mats[:, 0, 0] ** 2 + rot_mats[:, 1, 0] ** 2)
    return jnp.arctan2(-rot_mats[:, 2, 0], sy)


def dynamic_lmk_bin(full_pose):
    """Yaw bin index (0..78) of the dynamic contour landmark table."""
    B = full_pose.shape[0]
    aa = full_pose.reshape(B, -1, 3)[:, list(NECK_CHAIN)]           # (B,C,3)
    rms = batch_rodrigues(aa.reshape(-1, 3)).reshape(B, -1, 3, 3)
    rel = jnp.broadcast_to(jnp.eye(3, dtype=DTYPE), (B, 3, 3))
    for idx in range(len(NECK_CHAIN)):
        rel = jnp.matmul(rms[:, idx], rel)
    y = jnp.round(jnp.minimum(rot_mat_to_euler(rel) * 180.0 / np.pi, 39.0)).astype(jnp.int32)
    neg_mask = (y < 0).astype(jnp.int32)
    mask = (y < -39).astype(jnp.int32)
    neg_vals = mask * 78 + (1 - mask) * (39 - y)
    return neg_mask * neg_vals + (1 - neg_mask) * y


def vertices2landmarks(vertices, faces, lmk_faces_idx, lmk_bary_coords):
    # reference (gather) path only
    B, Vn = vertices.shape[:2]
    L = lmk_faces_idx.shape[1]
    lmk_faces = faces[lmk_faces_idx.reshape(-1)].reshape(B, L, 3)
    lmk_faces = lmk_faces + jnp.arange(B, dtype=lmk_faces.dtype)[:, None, None] * Vn
    lmk_vertices = vertices.reshape(-1, 3)[lmk_faces.reshape(-1)].reshape(B, L, 3, 3)
    return jnp.einsum('blfi,blf->bli', lmk_vertices, lmk_bary_coords)


def flame_forward(params, shape_params, expression_params, pose_params,
                  eye_pose_params=None, use_pallas=True):
    B = shape_params.shape[0]
    if eye_pose_params is None:
        eye_pose_params = jnp.zeros((B, 6), DTYPE)      # module's default eye_pose
    neck_pose = jnp.zeros((B, 3), DTYPE)                # module's default neck_pose
    betas = jnp.concatenate([shape_params, expression_params], axis=1)
    full_pose = jnp.concatenate(
        [pose_params[:, :3], neck_pose, pose_params[:, 3:], eye_pose_params], axis=1)

    # pose-only tiny math (stays in XLA, fused under the jit)
    rot_mats = batch_rodrigues(full_pose.reshape(-1, 3)).reshape(B, J, 3, 3)
    pose_feature = (rot_mats[:, 1:] - jnp.eye(3, dtype=DTYPE)).reshape(B, P)
    ybin = dynamic_lmk_bin(full_pose)

    if use_pallas:
        # joints via the folded regressor: trivial (B,K)x(K,3J) matmul,
        # columns already in (j, c) order -> no transpose
        joints = (params['jt_template'] + betas @ params['jreg_folded']).reshape(B, J, 3)
        _, A = batch_rigid_transform(rot_mats, joints, PARENTS)
        # (4, B, 3, J) -> row = k*3B + b*3 + c
        A_lbs = jnp.transpose(A[:, :, :3, :], (3, 0, 2, 1)).reshape(4 * B * 3, J)
        bp = jnp.concatenate([betas, pose_feature], axis=1)          # (B, K+P)
        # per-batch 2d-landmark selection: dynamic contour rows + static rows
        s2t = jnp.concatenate(
            [params['sel_dyn_T'][ybin],
             jnp.broadcast_to(params['sel_static_T'][None], (B, VP, L_STATIC))],
            axis=2)                                                   # (B, VP, L2)

        out, lmk2, lmk3 = flame_pallas(bp, params['dirs_all'], params['v_template_cm'],
                                       A_lbs, params['lbs_weights_cm'],
                                       s2t, params['sel_full_T'])
        vertices = out.reshape(B, 3, VP)[:, :, :V].transpose(0, 2, 1)
        landmarks2d = lmk2.reshape(B, 3, L2).transpose(0, 2, 1)
        landmarks3d = lmk3.reshape(B, 3, L_FULL).transpose(0, 2, 1)
    else:
        # pure-JAX reference path (original FLAME formulation)
        v_shaped = params['v_template'][None] + jnp.einsum(
            'bk,vck->bvc', betas, params['shapedirs'])
        joints = jnp.einsum('jv,bvc->bjc', params['J_regressor'], v_shaped)
        _, A = batch_rigid_transform(rot_mats, joints, PARENTS)
        pose_offsets = (pose_feature @ params['posedirs']).reshape(B, V, 3)
        v_posed = v_shaped + pose_offsets
        T = jnp.einsum('vj,bjkl->bvkl', params['lbs_weights'], A)
        vph = jnp.concatenate([v_posed, jnp.ones((B, V, 1), DTYPE)], -1)
        vertices = jnp.einsum('bvcd,bvd->bvc', T, vph)[:, :, :3]
        lmk_faces_idx = jnp.broadcast_to(params['lmk_faces_idx'][None], (B, L_STATIC))
        lmk_bary = jnp.broadcast_to(params['lmk_bary_coords'][None], (B, L_STATIC, 3))
        dyn_faces = params['dynamic_lmk_faces_idx'][ybin]
        dyn_bary = params['dynamic_lmk_bary_coords'][ybin]
        lmk_faces_idx = jnp.concatenate([dyn_faces, lmk_faces_idx], axis=1)
        lmk_bary = jnp.concatenate([dyn_bary, lmk_bary], axis=1)
        landmarks2d = vertices2landmarks(vertices, params['faces'], lmk_faces_idx, lmk_bary)
        full_faces = jnp.broadcast_to(params['full_lmk_faces_idx'][None], (B, L_FULL))
        full_bary = jnp.broadcast_to(params['full_lmk_bary_coords'][None], (B, L_FULL, 3))
        landmarks3d = vertices2landmarks(vertices, params['faces'], full_faces, full_bary)

    return vertices, landmarks2d, landmarks3d


# ============================ deterministic init ============================

def _bary_selection(faces_np, lmk_faces_idx_np, bary_np):
    """(L, VP) selection matrix: S[l, v] = sum of bary weights hitting vertex v."""
    L = int(lmk_faces_idx_np.shape[0])
    S = np.zeros((L, VP), np.float32)
    tri = faces_np[lmk_faces_idx_np]            # (L, 3)
    for l in range(L):
        for f in range(3):
            S[l, int(tri[l, f])] += float(bary_np[l, f])
    return S


def init_params(key):
    ks = jax.random.split(key, 12)
    v_template = jax.random.normal(ks[0], (V, 3), DTYPE) * 0.1
    shapedirs = jax.random.normal(ks[1], (V, 3, K), DTYPE) * 0.01
    posedirs = jax.random.normal(ks[2], (P, V * 3), DTYPE) * 0.01
    J_regressor = jax.random.uniform(ks[3], (J, V), DTYPE)
    J_regressor = J_regressor / jnp.sum(J_regressor, axis=1, keepdims=True)
    lbs_weights = jax.random.uniform(ks[4], (V, J), DTYPE)
    lbs_weights = lbs_weights / jnp.sum(lbs_weights, axis=1, keepdims=True)
    faces = jax.random.randint(ks[5], (F, 3), 0, V, dtype=jnp.int32)
    lmk_faces_idx = jax.random.randint(ks[6], (L_STATIC,), 0, F, dtype=jnp.int32)
    lmk_bary = jax.random.uniform(ks[7], (L_STATIC, 3), DTYPE)
    lmk_bary = lmk_bary / jnp.sum(lmk_bary, -1, keepdims=True)
    dyn_faces = jax.random.randint(ks[8], (79, L_DYN), 0, F, dtype=jnp.int32)
    dyn_bary = jax.random.uniform(ks[9], (79, L_DYN, 3), DTYPE)
    dyn_bary = dyn_bary / jnp.sum(dyn_bary, -1, keepdims=True)
    full_faces = jax.random.randint(ks[10], (L_FULL,), 0, F, dtype=jnp.int32)
    full_bary = jax.random.uniform(ks[11], (L_FULL, 3), DTYPE)
    full_bary = full_bary / jnp.sum(full_bary, -1, keepdims=True)

    # ---- lane-dense, coord-major, vertex-padded layouts for the kernel ----
    pad_v = VP - V
    shapedirs_cm = jnp.pad(jnp.transpose(shapedirs, (2, 1, 0)),
                           ((0, 0), (0, 0), (0, pad_v))).reshape(K, M3)
    posedirs_cm = jnp.pad(posedirs.reshape(P, V, 3).transpose(0, 2, 1),
                          ((0, 0), (0, 0), (0, pad_v))).reshape(P, M3)
    dirs_all = jnp.concatenate([shapedirs_cm, posedirs_cm], axis=0)      # (K+P, 3*VP)
    v_template_cm = jnp.pad(v_template.T, ((0, 0), (0, pad_v))).reshape(1, M3)
    lbs_weights_cm = jnp.pad(lbs_weights.T, ((0, 0), (0, pad_v)))        # (J, VP)

    # ---- joint regressor folded into the shape basis, (j, c)-ordered cols ----
    jt_template = (J_regressor @ v_template).reshape(1, J * 3)
    jreg_folded = jnp.einsum('jv,vck->kjc', J_regressor, shapedirs).reshape(K, J * 3)

    # ---- precomputed barycentric selection matrices (transposed for kernel) ----
    faces_np = np.asarray(faces)
    sel_static = _bary_selection(faces_np, np.asarray(lmk_faces_idx), np.asarray(lmk_bary))
    sel_full = _bary_selection(faces_np, np.asarray(full_faces), np.asarray(full_bary))
    dyn_faces_np = np.asarray(dyn_faces)
    dyn_bary_np = np.asarray(dyn_bary)
    sel_dyn = np.stack([_bary_selection(faces_np, dyn_faces_np[i], dyn_bary_np[i])
                        for i in range(dyn_faces_np.shape[0])], axis=0)  # (79, L_DYN, VP)

    return dict(
        # original layouts (pure-JAX reference path)
        v_template=v_template,
        shapedirs=shapedirs,
        posedirs=posedirs,
        J_regressor=J_regressor,
        lbs_weights=lbs_weights,
        # kernel layouts
        dirs_all=dirs_all,
        v_template_cm=v_template_cm,
        lbs_weights_cm=lbs_weights_cm,
        jt_template=jt_template,
        jreg_folded=jreg_folded,
        sel_static_T=jnp.asarray(sel_static.T),                 # (VP, L_STATIC)
        sel_full_T=jnp.asarray(sel_full.T),                     # (VP, L_FULL)
        sel_dyn_T=jnp.asarray(np.transpose(sel_dyn, (0, 2, 1))),  # (79, VP, L_DYN)
        # landmark tables (reference path)
        faces=faces,
        lmk_faces_idx=lmk_faces_idx,
        lmk_bary_coords=lmk_bary,
        dynamic_lmk_faces_idx=dyn_faces,
        dynamic_lmk_bary_coords=dyn_bary,
        full_lmk_faces_idx=full_faces,
        full_lmk_bary_coords=full_bary,
    )


if __name__ == "__main__":
    key = jax.random.PRNGKey(0)
    pkey, k1, k2, k3 = jax.random.split(key, 4)
    params = init_params(pkey)
    B = 2
    shape_params = jax.random.normal(k1, (B, N_SHAPE), DTYPE) * 0.5
    expression_params = jax.random.normal(k2, (B, N_EXPR), DTYPE) * 0.5
    pose_params = jax.random.normal(k3, (B, 6), DTYPE) * 0.2

    # whole forward under one jit: 1 Pallas call + a few fused XLA ops
    forward = jax.jit(functools.partial(flame_forward, use_pallas=True))
    vertices, lmk2d, lmk3d = forward(params, shape_params, expression_params, pose_params)
    jax.block_until_ready((vertices, lmk2d, lmk3d))

    # sanity-check against a pure-JAX reference of the same math
    v_ref, l2_ref, l3_ref = flame_forward(params, shape_params, expression_params,
                                          pose_params, use_pallas=False)
    assert vertices.shape == (B, V, 3)
    assert lmk2d.shape == (B, L2, 3)
    assert lmk3d.shape == (B, L_FULL, 3)
    assert jnp.allclose(vertices, v_ref, atol=1e-3, rtol=1e-2), "vertices mismatch"
    assert jnp.allclose(lmk2d, l2_ref, atol=1e-3, rtol=1e-2), "landmarks2d mismatch"
    assert jnp.allclose(lmk3d, l3_ref, atol=1e-3, rtol=1e-2), "landmarks3d mismatch"

    print("KERNEL_OK")
</pallas_src>

<mosaic_0001>
module attributes {stable_mosaic.version = 11 : i64} {
  func.func @_flame_kernel(%arg0: i32, %arg1: memref<2x51xf32, #tpu.memory_space<vmem>>, %arg2: memref<51x384xf32, #tpu.memory_space<vmem>>, %arg3: memref<1x384xf32, #tpu.memory_space<vmem>>, %arg4: memref<24x5xf32, #tpu.memory_space<vmem>>, %arg5: memref<5x128xf32, #tpu.memory_space<vmem>>, %arg6: memref<2x128x12xf32, #tpu.memory_space<vmem>>, %arg7: memref<128x12xf32, #tpu.memory_space<vmem>>, %arg8: memref<6x128xf32, #tpu.memory_space<vmem>>, %arg9: memref<6x12xf32, #tpu.memory_space<vmem>>, %arg10: memref<6x12xf32, #tpu.memory_space<vmem>>) attributes {dimension_semantics = [#tpu.dimension_semantics<arbitrary>], iteration_bounds = array<i64: 1>, scalar_prefetch = 0 : i64, scratch_operands = 0 : i64, tpu.core_type = #tpu.core_type<tc>, window_params = [{pipeline_mode = #tpu.pipeline_mode<synchronous>, transform_indices = @transform_0, window_bounds = array<i64: 2, 51>}, {pipeline_mode = #tpu.pipeline_mode<synchronous>, transform_indices = @transform_1, window_bounds = array<i64: 51, 384>}, {pipeline_mode = #tpu.pipeline_mode<synchronous>, transform_indices = @transform_2, window_bounds = array<i64: 1, 384>}, {pipeline_mode = #tpu.pipeline_mode<synchronous>, transform_indices = @transform_3, window_bounds = array<i64: 24, 5>}, {pipeline_mode = #tpu.pipeline_mode<synchronous>, transform_indices = @transform_4, window_bounds = array<i64: 5, 128>}, {pipeline_mode = #tpu.pipeline_mode<synchronous>, transform_indices = @transform_5, window_bounds = array<i64: 2, 128, 12>}, {pipeline_mode = #tpu.pipeline_mode<synchronous>, transform_indices = @transform_6, window_bounds = array<i64: 128, 12>}, {pipeline_mode = #tpu.pipeline_mode<synchronous>, transform_indices = @transform_7, window_bounds = array<i64: 6, 128>}, {pipeline_mode = #tpu.pipeline_mode<synchronous>, transform_indices = @transform_8, window_bounds = array<i64: 6, 12>}, {pipeline_mode = #tpu.pipeline_mode<synchronous>, transform_indices = @transform_9, window_bounds = array<i64: 6, 12>}]} {
    %c0 = arith.constant 0 : index
    %c0_0 = arith.constant 0 : index
    %0 = vector.load %arg3[%c0, %c0_0] : memref<1x384xf32, #tpu.memory_space<vmem>>, vector<1x384xf32>
    %c0_1 = arith.constant 0 : index
    %c0_2 = arith.constant 0 : index
    %1 = vector.load %arg1[%c0_1, %c0_2] : memref<2x51xf32, #tpu.memory_space<vmem>>, vector<2x51xf32>
    %c0_3 = arith.constant 0 : index
    %c0_4 = arith.constant 0 : index
    %2 = vector.load %arg2[%c0_3, %c0_4] : memref<51x384xf32, #tpu.memory_space<vmem>>, vector<51x384xf32>
    %cst = arith.constant dense<0.000000e+00> : vector<2x384xf32>
    %3 = tpu.matmul %1, %2, %cst {dimension_numbers = #tpu.dot_dimension_numbers<[1], [0], [0], [1], [0, 0, 1, 1], [], []>} : vector<2x51xf32>, vector<51x384xf32>, vector<2x384xf32> -> vector<2x384xf32>
    %4 = vector.broadcast %0 : vector<1x384xf32> to vector<2x384xf32>
    %5 = arith.addf %4, %3 : vector<2x384xf32>
    %c0_5 = arith.constant 0 : index
    %c0_6 = arith.constant 0 : index
    %6 = vector.load %arg4[%c0_5, %c0_6] : memref<24x5xf32, #tpu.memory_space<vmem>>, vector<24x5xf32>
    %c0_7 = arith.constant 0 : index
    %c0_8 = arith.constant 0 : index
    %7 = vector.load %arg5[%c0_7, %c0_8] : memref<5x128xf32, #tpu.memory_space<vmem>>, vector<5x128xf32>
    %cst_9 = arith.constant dense<0.000000e+00> : vector<24x128xf32>
    %8 = tpu.matmul %6, %7, %cst_9 {dimension_numbers = #tpu.dot_dimension_numbers<[1], [0], [0], [1], [0, 0, 1, 1], [], []>} : vector<24x5xf32>, vector<5x128xf32>, vector<24x128xf32> -> vector<24x128xf32>
    %c0_10 = arith.constant 0 : index
    %c0_11 = arith.constant 0 : index
    %9 = vector.load %arg7[%c0_10, %c0_11] : memref<128x12xf32, #tpu.memory_space<vmem>>, vector<128x12xf32>
    %10 = vector.extract_strided_slice %5 {offsets = [0, 0], sizes = [1, 128], strides = [1, 1]} : vector<2x384xf32> to vector<1x128xf32>
    %11 = vector.extract_strided_slice %5 {offsets = [0, 128], sizes = [1, 128], strides = [1, 1]} : vector<2x384xf32> to vector<1x128xf32>
    %12 = vector.extract_strided_slice %5 {offsets = [0, 256], sizes = [1, 128], strides = [1, 1]} : vector<2x384xf32> to vector<1x128xf32>
    %13 = vector.extract_strided_slice %8 {offsets = [0, 0], sizes = [3, 128], strides = [1, 1]} : vector<24x128xf32> to vector<3x128xf32>
    %14 = vector.broadcast %10 : vector<1x128xf32> to vector<3x128xf32>
    %15 = arith.mulf %13, %14 : vector<3x128xf32>
    %16 = vector.extract_strided_slice %8 {offsets = [6, 0], sizes = [3, 128], strides = [1, 1]} : vector<24x128xf32> to vector<3x128xf32>
    %17 = vector.broadcast %11 : vector<1x128xf32> to vector<3x128xf32>
    %18 = arith.mulf %16, %17 : vector<3x128xf32>
    %19 = arith.addf %15, %18 : vector<3x128xf32>
    %20 = vector.extract_strided_slice %8 {offsets = [12, 0], sizes = [3, 128], strides = [1, 1]} : vector<24x128xf32> to vector<3x128xf32>
    %21 = vector.broadcast %12 : vector<1x128xf32> to vector<3x128xf32>
    %22 = arith.mulf %20, %21 : vector<3x128xf32>
    %23 = arith.addf %19, %22 : vector<3x128xf32>
    %24 = vector.extract_strided_slice %8 {offsets = [18, 0], sizes = [3, 128], strides = [1, 1]} : vector<24x128xf32> to vector<3x128xf32>
    %25 = arith.addf %23, %24 : vector<3x128xf32>
    %c0_12 = arith.constant 0 : index
    %c0_13 = arith.constant 0 : index
    %c0_14 = arith.constant 0 : index
    %26 = vector.load %arg6[%c0_12, %c0_13, %c0_14] : memref<2x128x12xf32, #tpu.memory_space<vmem>>, vector<1x128x12xf32>
    %27 = vector.shape_cast %26 : vector<1x128x12xf32> to vector<128x12xf32>
    %cst_15 = arith.constant dense<0.000000e+00> : vector<3x12xf32>
    %28 = tpu.matmul %25, %27, %cst_15 {dimension_numbers = #tpu.dot_dimension_numbers<[1], [0], [0], [1], [0, 0, 1, 1], [], []>} : vector<3x128xf32>, vector<128x12xf32>, vector<3x12xf32> -> vector<3x12xf32>
    %cst_16 = arith.constant dense<0.000000e+00> : vector<3x12xf32>
    %29 = tpu.matmul %25, %9, %cst_16 {dimension_numbers = #tpu.dot_dimension_numbers<[1], [0], [0], [1], [0, 0, 1, 1], [], []>} : vector<3x128xf32>, vector<128x12xf32>, vector<3x12xf32> -> vector<3x12xf32>
    %30 = vector.extract_strided_slice %5 {offsets = [1, 0], sizes = [1, 128], strides = [1, 1]} : vector<2x384xf32> to vector<1x128xf32>
    %31 = vector.extract_strided_slice %5 {offsets = [1, 128], sizes = [1, 128], strides = [1, 1]} : vector<2x384xf32> to vector<1x128xf32>
    %32 = vector.extract_strided_slice %5 {offsets = [1, 256], sizes = [1, 128], strides = [1, 1]} : vector<2x384xf32> to vector<1x128xf32>
    %33 = vector.extract_strided_slice %8 {offsets = [3, 0], sizes = [3, 128], strides = [1, 1]} : vector<24x128xf32> to vector<3x128xf32>
    %34 = vector.broadcast %30 : vector<1x128xf32> to vector<3x128xf32>
    %35 = arith.mulf %33, %34 : vector<3x128xf32>
    %36 = vector.extract_strided_slice %8 {offsets = [9, 0], sizes = [3, 128], strides = [1, 1]} : vector<24x128xf32> to vector<3x128xf32>
    %37 = vector.broadcast %31 : vector<1x128xf32> to vector<3x128xf32>
    %38 = arith.mulf %36, %37 : vector<3x128xf32>
    %39 = arith.addf %35, %38 : vector<3x128xf32>
    %40 = vector.extract_strided_slice %8 {offsets = [15, 0], sizes = [3, 128], strides = [1, 1]} : vector<24x128xf32> to vector<3x128xf32>
    %41 = vector.broadcast %32 : vector<1x128xf32> to vector<3x128xf32>
    %42 = arith.mulf %40, %41 : vector<3x128xf32>
    %43 = arith.addf %39, %42 : vector<3x128xf32>
    %44 = vector.extract_strided_slice %8 {offsets = [21, 0], sizes = [3, 128], strides = [1, 1]} : vector<24x128xf32> to vector<3x128xf32>
    %45 = arith.addf %43, %44 : vector<3x128xf32>
    %c1 = arith.constant 1 : index
    %c0_17 = arith.constant 0 : index
    %c0_18 = arith.constant 0 : index
    %46 = vector.load %arg6[%c1, %c0_17, %c0_18] : memref<2x128x12xf32, #tpu.memory_space<vmem>>, vector<1x128x12xf32>
    %47 = vector.shape_cast %46 : vector<1x128x12xf32> to vector<128x12xf32>
    %cst_19 = arith.constant dense<0.000000e+00> : vector<3x12xf32>
    %48 = tpu.matmul %45, %47, %cst_19 {dimension_numbers = #tpu.dot_dimension_numbers<[1], [0], [0], [1], [0, 0, 1, 1], [], []>} : vector<3x128xf32>, vector<128x12xf32>, vector<3x12xf32> -> vector<3x12xf32>
    %cst_20 = arith.constant dense<0.000000e+00> : vector<3x12xf32>
    %49 = tpu.matmul %45, %9, %cst_20 {dimension_numbers = #tpu.dot_dimension_numbers<[1], [0], [0], [1], [0, 0, 1, 1], [], []>} : vector<3x128xf32>, vector<128x12xf32>, vector<3x12xf32> -> vector<3x12xf32>
    %50 = tpu.concatenate %25, %45 in 0 : vector<3x128xf32>, vector<3x128xf32> -> vector<6x128xf32>
    %c0_21 = arith.constant 0 : index
    %c0_22 = arith.constant 0 : index
    %51 = vector.load %arg8[%c0_21, %c0_22] : memref<6x128xf32, #tpu.memory_space<vmem>>, vector<6x128xf32>
    tpu.vector_store %arg8[%c0_21, %c0_22], %50 {strides = array<i32>} : memref<6x128xf32, #tpu.memory_space<vmem>>, vector<6x128xf32>,
    %52 = tpu.concatenate %28, %48 in 0 : vector<3x12xf32>, vector<3x12xf32> -> vector<6x12xf32>
    %c0_23 = arith.constant 0 : index
    %c0_24 = arith.constant 0 : index
    %53 = vector.load %arg9[%c0_23, %c0_24] : memref<6x12xf32, #tpu.memory_space<vmem>>, vector<6x12xf32>
    tpu.vector_store %arg9[%c0_23, %c0_24], %52 {strides = array<i32>} : memref<6x12xf32, #tpu.memory_space<vmem>>, vector<6x12xf32>,
    %54 = tpu.concatenate %29, %49 in 0 : vector<3x12xf32>, vector<3x12xf32> -> vector<6x12xf32>
    %c0_25 = arith.constant 0 : index
    %c0_26 = arith.constant 0 : index
    %55 = vector.load %arg10[%c0_25, %c0_26] : memref<6x12xf32, #tpu.memory_space<vmem>>, vector<6x12xf32>
    tpu.vector_store %arg10[%c0_25, %c0_26], %54 {strides = array<i32>} : memref<6x12xf32, #tpu.memory_space<vmem>>, vector<6x12xf32>,
    return
  }
  func.func @transform_0(%arg0: i32) -> (i32, i32) {
    %c0_i32 = arith.constant 0 : i32
    %c0_i32_0 = arith.constant 0 : i32
    %c0_i32_1 = arith.constant 0 : i32
    return %c0_i32, %c0_i32_0 : i32, i32
  }
  func.func @transform_1(%arg0: i32) -> (i32, i32) {
    %c0_i32 = arith.constant 0 : i32
    %c0_i32_0 = arith.constant 0 : i32
    %c0_i32_1 = arith.constant 0 : i32
    return %c0_i32, %c0_i32_0 : i32, i32
  }
  func.func @transform_2(%arg0: i32) -> (i32, i32) {
    %c0_i32 = arith.constant 0 : i32
    %c0_i32_0 = arith.constant 0 : i32
    %c0_i32_1 = arith.constant 0 : i32
    return %c0_i32, %c0_i32_0 : i32, i32
  }
  func.func @transform_3(%arg0: i32) -> (i32, i32) {
    %c0_i32 = arith.constant 0 : i32
    %c0_i32_0 = arith.constant 0 : i32
    %c0_i32_1 = arith.constant 0 : i32
    return %c0_i32, %c0_i32_0 : i32, i32
  }
  func.func @transform_4(%arg0: i32) -> (i32, i32) {
    %c0_i32 = arith.constant 0 : i32
    %c0_i32_0 = arith.constant 0 : i32
    %c0_i32_1 = arith.constant 0 : i32
    return %c0_i32, %c0_i32_0 : i32, i32
  }
  func.func @transform_5(%arg0: i32) -> (i32, i32, i32) {
    %c0_i32 = arith.constant 0 : i32
    %c0_i32_0 = arith.constant 0 : i32
    %c0_i32_1 = arith.constant 0 : i32
    %c0_i32_2 = arith.constant 0 : i32
    return %c0_i32, %c0_i32_0, %c0_i32_1 : i32, i32, i32
  }
  func.func @transform_6(%arg0: i32) -> (i32, i32) {
    %c0_i32 = arith.constant 0 : i32
    %c0_i32_0 = arith.constant 0 : i32
    %c0_i32_1 = arith.constant 0 : i32
    return %c0_i32, %c0_i32_0 : i32, i32
  }
  func.func @transform_7(%arg0: i32) -> (i32, i32) {
    %c0_i32 = arith.constant 0 : i32
    %c0_i32_0 = arith.constant 0 : i32
    %c0_i32_1 = arith.constant 0 : i32
    return %c0_i32, %c0_i32_0 : i32, i32
  }
  func.func @transform_8(%arg0: i32) -> (i32, i32) {
    %c0_i32 = arith.constant 0 : i32
    %c0_i32_0 = arith.constant 0 : i32
    %c0_i32_1 = arith.constant 0 : i32
    return %c0_i32, %c0_i32_0 : i32, i32
  }
  func.func @transform_9(%arg0: i32) -> (i32, i32) {
    %c0_i32 = arith.constant 0 : i32
    %c0_i32_0 = arith.constant 0 : i32
    %c0_i32_1 = arith.constant 0 : i32
    return %c0_i32, %c0_i32_0 : i32, i32
  }
}

</mosaic_0001>

<llo_original>
// kernel: flame_forward.1
$region0: #{flame_forward.1}
  #allocation0 [shape = 'u32[]', space=smem, size = 0x4, offset = 0x4, fixed_abs, tag = 'smem constant byte address 0x4 - core index']
  #allocation1 [shape = 'u32[144,128]{1,0:T(1,128)}', space=vmem, size = 0x12000, scoped, tag = 'internal scratch']
  %s0 = inlined_call_operand.vmem [shape: f32[2,51], index: 0, kind: input, shape index: {}]
  %s1 = inlined_call_operand.vmem [shape: f32[51,384], index: 1, kind: input, shape index: {}]
  %s2 = inlined_call_operand.vmem [shape: f32[1,384], index: 2, kind: input, shape index: {}]
  %s3 = inlined_call_operand.vmem [shape: f32[24,5], index: 3, kind: input, shape index: {}]
  %s4 = inlined_call_operand.vmem [shape: f32[5,128], index: 4, kind: input, shape index: {}]
  %s5 = inlined_call_operand.vmem [shape: f32[2,128,12], index: 5, kind: input, shape index: {}]
  %s6 = inlined_call_operand.vmem [shape: f32[128,12], index: 6, kind: input, shape index: {}]
  %s7 = inlined_call_operand.vmem [shape: f32[6,128], index: 7, kind: output, shape index: {0}]
  %s8 = inlined_call_operand.vmem [shape: f32[6,12], index: 8, kind: output, shape index: {1}]
  %s9 = inlined_call_operand.vmem [shape: f32[6,12], index: 9, kind: output, shape index: {2}]
  %10 = xla_tuple %s7, %s8, %s9
  %s11 = sld [smem:[#allocation0]]
  $region54: #{flame_forward.1} parent=0
    _
  %s13 = ssub.s32 1, %s11
  %s14 = scalar_select 0, %s13, %s11
  // Predicated region
  $region2: #{flame_forward.1} parent=0 // pred_check
    _
  $region3: #{flame_forward.1} parent=0 // pred_check_branch
    %16 = sbr.rel (0) target = $region5
  $region4: #{flame_forward.1} parent=0 // pred_region
    _
  $region5: #{flame_forward.1} parent=0 // pred_fallthru
    _
  // Predicated region
  $region6: #{flame_forward.1} parent=0 // pred_check
    _
  $region7: #{flame_forward.1} parent=0 // pred_check_branch
    %18 = sbr.rel (0) target = $region9
  $region8: #{flame_forward.1} parent=0 // pred_region
    _
  $region9: #{flame_forward.1} parent=0 // pred_fallthru
    _
  // Predicated region
  $region10: #{flame_forward.1} parent=0 // pred_check
    _
  $region11: #{flame_forward.1} parent=0 // pred_check_branch
    %20 = sbr.rel (0) target = $region13
  $region12: #{flame_forward.1} parent=0 // pred_region
    _
  $region13: #{flame_forward.1} parent=0 // pred_fallthru
    _
  // Predicated region
  $region14: #{flame_forward.1} parent=0 // pred_check
    _
  $region15: #{flame_forward.1} parent=0 // pred_check_branch
    %22 = sbr.rel (0) target = $region17
  $region16: #{flame_forward.1} parent=0 // pred_region
    _
  $region17: #{flame_forward.1} parent=0 // pred_fallthru
    _
  // Predicated region
  $region18: #{flame_forward.1} parent=0 // pred_check
    _
  $region19: #{flame_forward.1} parent=0 // pred_check_branch
    %24 = sbr.rel (0) target = $region21
  $region20: #{flame_forward.1} parent=0 // pred_region
    _
  $region21: #{flame_forward.1} parent=0 // pred_fallthru
    _
  // Predicated region
  $region22: #{flame_forward.1} parent=0 // pred_check
    _
  $region23: #{flame_forward.1} parent=0 // pred_check_branch
    %26 = sbr.rel (0) target = $region25
  $region24: #{flame_forward.1} parent=0 // pred_region
    _
  $region25: #{flame_forward.1} parent=0 // pred_fallthru
    _
  // Predicated region
  $region26: #{flame_forward.1} parent=0 // pred_check
    _
  $region27: #{flame_forward.1} parent=0 // pred_check_branch
    %28 = sbr.rel (0) target = $region29
  $region28: #{flame_forward.1} parent=0 // pred_region
    _
  $region29: #{flame_forward.1} parent=0 // pred_fallthru
    _
  %v29 = vld [vmem:[%s2] sm:$0x7]
  %v30 = vld [vmem:[%s0] sm:$0x3]
  %v31 = vld [vmem:[%s1] sm:$0xff]
  %v32 = vld [vmem:[%s1 + $0x8] sm:$0xff]
  %v33 = vld [vmem:[%s1 + $0x10] sm:$0xff]
  %v34 = vld [vmem:[%s1 + $0x18] sm:$0xff]
  %v35 = vld [vmem:[%s1 + $0x20] sm:$0xff]
  %v36 = vld [vmem:[%s1 + $0x28] sm:$0xff]
  %v37 = vld [vmem:[%s1 + $0x30] sm:$0xff]
  %v38 = vld [vmem:[%s1 + $0x38] sm:$0xff]
  %v39 = vld [vmem:[%s1 + $0x40] sm:$0xff]
  %v40 = vld [vmem:[%s1 + $0x48] sm:$0xff]
  %v41 = vld [vmem:[%s1 + $0x50] sm:$0xff]
  %v42 = vld [vmem:[%s1 + $0x58] sm:$0xff]
  %v43 = vld [vmem:[%s1 + $0x60] sm:$0xff]
  %v44 = vld [vmem:[%s1 + $0x68] sm:$0xff]
  %v45 = vld [vmem:[%s1 + $0x70] sm:$0xff]
  %v46 = vld [vmem:[%s1 + $0x78] sm:$0xff]
  %v47 = vld [vmem:[%s1 + $0x80] sm:$0xff]
  %v48 = vld [vmem:[%s1 + $0x88] sm:$0xff]
  %v49 = vld [vmem:[%s1 + $0x90] sm:$0x7]
  %v50 = vld [vmem:[%s1 + $0x98] sm:$0x7]
  %v51 = vld [vmem:[%s1 + $0xa0] sm:$0x7]
  %vm52 = vcmask 416768
  %v54 = vsel %vm52, %v30, 0
  %vm56 = vcmask 1042432
  %v58 = vsel %vm56, %v49, 0
  %v61 = vsel %vm56, %v50, 0
  %v64 = vsel %vm56, %v51, 0
  %66 = vmatprep.subr.mxu0 %v32
  %67 = vmatpush1.msra.mxu0 %v31
  %68 = vmatprep.subr.mxu0 %v35
  %69 = vmatpush1.msra.mxu0 %v34
  %70 = vmatprep.subr.mxu0 %v38
  %71 = vmatpush1.msra.mxu0 %v37
  %72 = vmatprep.subr.mxu0 %v41
  %73 = vmatpush1.msra.mxu0 %v40
  %74 = vmatprep.subr.mxu0 %v44
  %75 = vmatpush1.msra.mxu0 %v43
  %76 = vmatprep.subr.mxu0 %v47
  %77 = vmatpush1.msra.mxu0 %v46
  %78 = vmatprep.subr.mxu0 %v61
  %79 = vmatpush1.msra.mxu0 %v58
  %80 = vmatprep.subr.mxu0 0.0
  %81 = vmatpush1.msra.mxu0 0.0
  %82 = vmatprep.subr.mxu0 0.0
  %83 = vmatpush1.msra.mxu0 0.0
  %84 = vmatprep.subr.mxu0 0.0
  %85 = vmatpush1.msra.mxu0 0.0
  %86 = vmatprep.subr.mxu0 0.0
  %87 = vmatpush1.msra.mxu0 0.0
  %88 = vmatprep.subr.mxu0 0.0
  %89 = vmatpush1.msra.mxu0 0.0
  %90 = vmatprep.subr.mxu0 0.0
  %91 = vmatpush1.msra.mxu0 0.0
  %92 = vmatprep.subr.mxu0 0.0
  %93 = vmatpush1.msra.mxu0 0.0
  %94 = vmatprep.subr.mxu0 0.0
  %95 = vmatpush1.msra.mxu0 0.0
  %96 = vmatprep.subr.mxu0 0.0
  %97 = vmatpush1.msra.mxu0 0.0
  %98 = vmatprep.subr.mxu0 0.0
  %99 = vmatpush1.msra.mxu0 0.0
  %100 = vmatprep.subr.mxu0 0.0
  %101 = vmatpush1.msra.mxu0 0.0
  %102 = vmatprep.subr.mxu0 0.0
  %103 = vmatpush1.msra.mxu0 0.0
  %104 = vmatprep.subr.mxu0 0.0
  %105 = vmatpush1.msra.mxu0 0.0
  %106 = vmatprep.subr.mxu0 0.0
  %107 = vmatpush1.msra.mxu0 0.0
  %108 = vmatprep.subr.mxu0 0.0
  %109 = vmatpush1.msra.mxu0 0.0
  %110 = vmatprep.subr.mxu0 0.0
  %111 = vmatpush1.msra.mxu0 0.0
  %112 = vmatprep.subr.mxu0 0.0
  %113 = vmatpush1.msra.mxu0 0.0
  %114 = vmatprep.subr.mxu0 0.0
  %115 = vmatpush1.msra.mxu0 0.0
  %116 = vmatprep.subr.mxu0 0.0
  %117 = vmatpush1.msra.mxu0 0.0
  %118 = vmatprep.subr.mxu0 0.0
  %119 = vmatpush1.msra.mxu0 0.0
  %120 = vmatprep.subr.mxu0 0.0
  %121 = vmatpush1.msra.mxu0 0.0
  %122 = vmatprep.subr.mxu0 0.0
  %123 = vmatpush1.msra.mxu0 0.0
  %124 = vmatprep.subr.mxu0 0.0
  %125 = vmatpush1.msra.mxu0 0.0
  %126 = vmatprep.subr.mxu0 0.0
  %127 = vmatpush1.msra.mxu0 0.0
  %128 = vmatprep.subr.mxu0 0.0
  %129 = vmatpush1.msra.mxu0 0.0
  %130 = vmatprep.mubr.f32.mxu0 0.0
  %131 = vmatmul.mubr.f32.gmra.mrb[0].mxu0 %v54
  %v132 = vpop.f32.mrb[0].mxu0
  %v133 = vadd.f32 0.0, %v132
  %v134 = vpop.f32.mrb[0].mxu0
  %v135 = vadd.f32 0.0, %v134
  %136 = vdwg.mxu0
  %137 = vmatprep.subr.mxu0 0.0
  %138 = vmatpush1.msra.mxu0 %v33
  %139 = vmatprep.subr.mxu0 0.0
  %140 = vmatpush1.msra.mxu0 %v36
  %141 = vmatprep.subr.mxu0 0.0
  %142 = vmatpush1.msra.mxu0 %v39
  %143 = vmatprep.subr.mxu0 0.0
  %144 = vmatpush1.msra.mxu0 %v42
  %145 = vmatprep.subr.mxu0 0.0
  %146 = vmatpush1.msra.mxu0 %v45
  %147 = vmatprep.subr.mxu0 0.0
  %148 = vmatpush1.msra.mxu0 %v48
  %149 = vmatprep.subr.mxu0 0.0
  %150 = vmatpush1.msra.mxu0 %v64
  %151 = vmatprep.subr.mxu0 0.0
  %152 = vmatpush1.msra.mxu0 0.0
  %153 = vmatprep.subr.mxu0 0.0
  %154 = vmatpush1.msra.mxu0 0.0
  %155 = vmatprep.subr.mxu0 0.0
  %156 = vmatpush1.msra.mxu0 0.0
  %157 = vmatprep.subr.mxu0 0.0
  %158 = vmatpush1.msra.mxu0 0.0
  %159 = vmatprep.subr.mxu0 0.0
  %160 = vmatpush1.msra.mxu0 0.0
  %161 = vmatprep.subr.mxu0 0.0
  %162 = vmatpush1.msra.mxu0 0.0
  %163 = vmatprep.subr.mxu0 0.0
  %164 = vmatpush1.msra.mxu0 0.0
  %165 = vmatprep.subr.mxu0 0.0
  %166 = vmatpush1.msra.mxu0 0.0
  %167 = vmatprep.subr.mxu0 0.0
  %168 = vmatpush1.msra.mxu0 0.0
  %169 = vmatprep.subr.mxu0 0.0
  %170 = vmatpush1.msra.mxu0 0.0
  %171 = vmatprep.subr.mxu0 0.0
  %172 = vmatpush1.msra.mxu0 0.0
  %173 = vmatprep.subr.mxu0 0.0
  %174 = vmatpush1.msra.mxu0 0.0
  %175 = vmatprep.subr.mxu0 0.0
  %176 = vmatpush1.msra.mxu0 0.0
  %177 = vmatprep.subr.mxu0 0.0
  %178 = vmatpush1.msra.mxu0 0.0
  %179 = vmatprep.subr.mxu0 0.0
  %180 = vmatpush1.msra.mxu0 0.0
  %181 = vmatprep.subr.mxu0 0.0
  %182 = vmatpush1.msra.mxu0 0.0
  %183 = vmatprep.subr.mxu0 0.0
  %184 = vmatpush1.msra.mxu0 0.0
  %185 = vmatprep.subr.mxu0 0.0
  %186 = vmatpush1.msra.mxu0 0.0
  %187 = vmatprep.subr.mxu0 0.0
  %188 = vmatpush1.msra.mxu0 0.0
  %189 = vmatprep.subr.mxu0 0.0
  %190 = vmatpush1.msra.mxu0 0.0
  %191 = vmatprep.subr.mxu0 0.0
  %192 = vmatpush1.msra.mxu0 0.0
  %193 = vmatprep.subr.mxu0 0.0
  %194 = vmatpush1.msra.mxu0 0.0
  %195 = vmatprep.subr.mxu0 0.0
  %196 = vmatpush1.msra.mxu0 0.0
  %197 = vmatprep.subr.mxu0 0.0
  %198 = vmatpush1.msra.mxu0 0.0
  %199 = vmatprep.subr.mxu0 0.0
  %200 = vmatpush1.msra.mxu0 0.0
  %201 = vmatprep.mubr.f32.mxu0 0.0
  %202 = vmatmul.mubr.f32.gmra.mrb[0].mxu0 %v54
  %v203 = vpop.f32.mrb[0].mxu0
  %v204 = vadd.f32 0.0, %v203
  %v205 = vpop.f32.mrb[0].mxu0
  %206 = vdwg.mxu0
  %v208 = vlaneseq
  %v209 = vshrl.u32 %v208, 7
  %v210 = vsub.s32 0, %v209
  %v211 = vrot.slane %v29, %v210
  %v212 = vlaneseq
  %v213 = vshrl.u32 %v212, 7
  %v214 = vsub.s32 1, %v213
  %v215 = vrot.slane %v29, %v214
  %v216 = vlaneseq
  %v217 = vshrl.u32 %v216, 7
  %v218 = vsub.s32 2, %v217
  %v219 = vrot.slane %v29, %v218
  %v223 = vadd.f32 %v211, %v133
  %v224 = vadd.f32 %v215, %v135
  %v225 = vadd.f32 %v219, %v204
  %v226 = vld [vmem:[%s3] sm:$0xff]
  %v227 = vld [vmem:[%s3 + $0x8] sm:$0xff]
  %v228 = vld [vmem:[%s3 + $0x10] sm:$0xff]
  %v229 = vld [vmem:[%s4] sm:$0x1f]
  %vm230 = vcmask 39936
  %v232 = vsel %vm230, %v226, 0
  %v235 = vsel %vm230, %v227, 0
  %v238 = vsel %vm230, %v228, 0
  %vm240 = vcmask 1044480
  %v242 = vsel %vm240, %v229, 0
  %244 = vmatprep.subr.mxu0 0.0
  %245 = vmatpush1.msra.mxu0 %v242
  %246 = vmatprep.subr.mxu0 0.0
  %247 = vmatpush1.msra.mxu0 0.0
  %248 = vmatprep.subr.mxu0 0.0
  %249 = vmatpush1.msra.mxu0 0.0
  %250 = vmatprep.subr.mxu0 0.0
  %251 = vmatpush1.msra.mxu0 0.0
  %252 = vmatprep.subr.mxu0 0.0
  %253 = vmatpush1.msra.mxu0 0.0
  %254 = vmatprep.subr.mxu0 0.0
  %255 = vmatpush1.msra.mxu0 0.0
  %256 = vmatprep.subr.mxu0 0.0
  %257 = vmatpush1.msra.mxu0 0.0
  %258 = vmatprep.subr.mxu0 0.0
  %259 = vmatpush1.msra.mxu0 0.0
  %260 = vmatprep.subr.mxu0 0.0
  %261 = vmatpush1.msra.mxu0 0.0
  %262 = vmatprep.subr.mxu0 0.0
  %263 = vmatpush1.msra.mxu0 0.0
  %264 = vmatprep.subr.mxu0 0.0
  %265 = vmatpush1.msra.mxu0 0.0
  %266 = vmatprep.subr.mxu0 0.0
  %267 = vmatpush1.msra.mxu0 0.0
  %268 = vmatprep.subr.mxu0 0.0
  %269 = vmatpush1.msra.mxu0 0.0
  %270 = vmatprep.subr.mxu0 0.0
  %271 = vmatpush1.msra.mxu0 0.0
  %272 = vmatprep.subr.mxu0 0.0
  %273 = vmatpush1.msra.mxu0 0.0
  %274 = vmatprep.subr.mxu0 0.0
  %275 = vmatpush1.msra.mxu0 0.0
  %276 = vmatprep.subr.mxu0 0.0
  %277 = vmatpush1.msra.mxu0 0.0
  %278 = vmatprep.subr.mxu0 0.0
  %279 = vmatpush1.msra.mxu0 0.0
  %280 = vmatprep.subr.mxu0 0.0
  %281 = vmatpush1.msra.mxu0 0.0
  %282 = vmatprep.subr.mxu0 0.0
  %283 = vmatpush1.msra.mxu0 0.0
  %284 = vmatprep.subr.mxu0 0.0
  %285 = vmatpush1.msra.mxu0 0.0
  %286 = vmatprep.subr.mxu0 0.0
  %287 = vmatpush1.msra.mxu0 0.0
  %288 = vmatprep.subr.mxu0 0.0
  %289 = vmatpush1.msra.mxu0 0.0
  %290 = vmatprep.subr.mxu0 0.0
  %291 = vmatpush1.msra.mxu0 0.0
  %292 = vmatprep.subr.mxu0 0.0
  %293 = vmatpush1.msra.mxu0 0.0
  %294 = vmatprep.subr.mxu0 0.0
  %295 = vmatpush1.msra.mxu0 0.0
  %296 = vmatprep.subr.mxu0 0.0
  %297 = vmatpush1.msra.mxu0 0.0
  %298 = vmatprep.subr.mxu0 0.0
  %299 = vmatpush1.msra.mxu0 0.0
  %300 = vmatprep.subr.mxu0 0.0
  %301 = vmatpush1.msra.mxu0 0.0
  %302 = vmatprep.subr.mxu0 0.0
  %303 = vmatpush1.msra.mxu0 0.0
  %304 = vmatprep.subr.mxu0 0.0
  %305 = vmatpush1.msra.mxu0 0.0
  %306 = vmatprep.subr.mxu0 0.0
  %307 = vmatpush1.msra.mxu0 0.0
  %308 = vmatprep.mubr.f32.mxu0 0.0
  %309 = vmatmul.mubr.f32.gmra.mrb[0].mxu0 %v232
  %v310 = vpop.f32.mrb[0].mxu0
  %v311 = vadd.f32 0.0, %v310
  %v312 = vpop.f32.mrb[0].mxu0
  %313 = vmatprep.mubr.f32.mxu0 0.0
  %314 = vmatmul.mubr.f32.gmra.mrb[0].mxu0 %v235
  %v315 = vpop.f32.mrb[0].mxu0
  %v316 = vadd.f32 0.0, %v315
  %v317 = vpop.f32.mrb[0].mxu0
  %318 = vmatprep.mubr.f32.mxu0 0.0
  %319 = vmatmul.mubr.f32.gmra.mrb[0].mxu0 %v238
  %v320 = vpop.f32.mrb[0].mxu0
  %v321 = vadd.f32 0.0, %v320
  %v322 = vpop.f32.mrb[0].mxu0
  %323 = vdwg.mxu0
  %v324 = vld [vmem:[%s6] sm:$0xff]
  %v325 = vld [vmem:[%s6 + $0x8] sm:$0xff]
  %v326 = vld [vmem:[%s6 + $0x10] sm:$0xff]
  %v327 = vld [vmem:[%s6 + $0x18] sm:$0xff]
  %v328 = vld [vmem:[%s6 + $0x20] sm:$0xff]
  %v329 = vld [vmem:[%s6 + $0x28] sm:$0xff]
  %v330 = vld [vmem:[%s6 + $0x30] sm:$0xff]
  %v331 = vld [vmem:[%s6 + $0x38] sm:$0xff]
  %v332 = vld [vmem:[%s6 + $0x40] sm:$0xff]
  %v333 = vld [vmem:[%s6 + $0x48] sm:$0xff]
  %v334 = vld [vmem:[%s6 + $0x50] sm:$0xff]
  %v335 = vld [vmem:[%s6 + $0x58] sm:$0xff]
  %v336 = vld [vmem:[%s6 + $0x60] sm:$0xff]
  %v337 = vld [vmem:[%s6 + $0x68] sm:$0xff]
  %v338 = vld [vmem:[%s6 + $0x70] sm:$0xff]
  %v339 = vld [vmem:[%s6 + $0x78] sm:$0xff]
  %v340 = vlaneseq
  %v341 = vshrl.u32 %v340, 7
  %v342 = vsub.s32 0, %v341
  %v343 = vrot.slane %v223, %v342
  %v344 = vmul.f32 %v311, %v343
  %v345 = vlaneseq
  %v346 = vshrl.u32 %v345, 7
  %v347 = vsub.s32 0, %v346
  %v348 = vrot.slane %v224, %v347
  %v349 = vmul.f32 %v311, %v348
  %v350 = vmul.f32 %v316, %v348
  %vm353 = vcmask 1041408
  %v354 = vrot.slane %v349, 6
  %v355 = vrot.slane %v350, 6
  %v356 = vsel %vm353, %v354, %v355
  %v358 = vadd.f32 %v344, %v356
  %v359 = vlaneseq
  %v360 = vshrl.u32 %v359, 7
  %v361 = vsub.s32 0, %v360
  %v362 = vrot.slane %v225, %v361
  %v363 = vmul.f32 %v316, %v362
  %v365 = vrot.slane %v363, 4
  %v367 = vadd.f32 %v358, %v365
  %v369 = vrot.slane %v321, 2
  %v371 = vadd.f32 %v367, %v369
  %v372 = vld [vmem:[%s5] sm:$0xff]
  %v373 = vld [vmem:[%s5 + $0x8] sm:$0xff]
  %v374 = vld [vmem:[%s5 + $0x10] sm:$0xff]
  %v375 = vld [vmem:[%s5 + $0x18] sm:$0xff]
  %v376 = vld [vmem:[%s5 + $0x20] sm:$0xff]
  %v377 = vld [vmem:[%s5 + $0x28] sm:$0xff]
  %v378 = vld [vmem:[%s5 + $0x30] sm:$0xff]
  %v379 = vld [vmem:[%s5 + $0x38] sm:$0xff]
  %v380 = vld [vmem:[%s5 + $0x40] sm:$0xff]
  %v381 = vld [vmem:[%s5 + $0x48] sm:$0xff]
  %v382 = vld [vmem:[%s5 + $0x50] sm:$0xff]
  %v383 = vld [vmem:[%s5 + $0x58] sm:$0xff]
  %v384 = vld [vmem:[%s5 + $0x60] sm:$0xff]
  %v385 = vld [vmem:[%s5 + $0x68] sm:$0xff]
  %v386 = vld [vmem:[%s5 + $0x70] sm:$0xff]
  %v387 = vld [vmem:[%s5 + $0x78] sm:$0xff]
  %388 = vmatprep.subr.mxu0 0.0
  %389 = vmatpush1.msra.mxu0 %v372
  %390 = vmatprep.subr.mxu0 0.0
  %391 = vmatpush1.msra.mxu0 %v373
  %392 = vmatprep.subr.mxu0 0.0
  %393 = vmatpush1.msra.mxu0 %v374
  %394 = vmatprep.subr.mxu0 0.0
  %395 = vmatpush1.msra.mxu0 %v375
  %396 = vmatprep.subr.mxu0 0.0
  %397 = vmatpush1.msra.mxu0 %v376
  %398 = vmatprep.subr.mxu0 0.0
  %399 = vmatpush1.msra.mxu0 %v377
  %400 = vmatprep.subr.mxu0 0.0
  %401 = vmatpush1.msra.mxu0 %v378
  %402 = vmatprep.subr.mxu0 0.0
  %403 = vmatpush1.msra.mxu0 %v379
  %404 = vmatprep.subr.mxu0 0.0
  %405 = vmatpush1.msra.mxu0 %v380
  %406 = vmatprep.subr.mxu0 0.0
  %407 = vmatpush1.msra.mxu0 %v381
  %408 = vmatprep.subr.mxu0 0.0
  %409 = vmatpush1.msra.mxu0 %v382
  %410 = vmatprep.subr.mxu0 0.0
  %411 = vmatpush1.msra.mxu0 %v383
  %412 = vmatprep.subr.mxu0 0.0
  %413 = vmatpush1.msra.mxu0 %v384
  %414 = vmatprep.subr.mxu0 0.0
  %415 = vmatpush1.msra.mxu0 %v385
  %416 = vmatprep.subr.mxu0 0.0
  %417 = vmatpush1.msra.mxu0 %v386
  %418 = vmatprep.subr.mxu0 0.0
  %419 = vmatpush1.msra.mxu0 %v387
  %420 = vmatprep.subr.mxu0 0.0
  %421 = vmatpush1.msra.mxu0 0.0
  %422 = vmatprep.subr.mxu0 0.0
  %423 = vmatpush1.msra.mxu0 0.0
  %424 = vmatprep.subr.mxu0 0.0
  %425 = vmatpush1.msra.mxu0 0.0
  %426 = vmatprep.subr.mxu0 0.0
  %427 = vmatpush1.msra.mxu0 0.0
  %428 = vmatprep.subr.mxu0 0.0
  %429 = vmatpush1.msra.mxu0 0.0
  %430 = vmatprep.subr.mxu0 0.0
  %431 = vmatpush1.msra.mxu0 0.0
  %432 = vmatprep.subr.mxu0 0.0
  %433 = vmatpush1.msra.mxu0 0.0
  %434 = vmatprep.subr.mxu0 0.0
  %435 = vmatpush1.msra.mxu0 0.0
  %436 = vmatprep.subr.mxu0 0.0
  %437 = vmatpush1.msra.mxu0 0.0
  %438 = vmatprep.subr.mxu0 0.0
  %439 = vmatpush1.msra.mxu0 0.0
  %440 = vmatprep.subr.mxu0 0.0
  %441 = vmatpush1.msra.mxu0 0.0
  %442 = vmatprep.subr.mxu0 0.0
  %443 = vmatpush1.msra.mxu0 0.0
  %444 = vmatprep.subr.mxu0 0.0
  %445 = vmatpush1.msra.mxu0 0.0
  %446 = vmatprep.subr.mxu0 0.0
  %447 = vmatpush1.msra.mxu0 0.0
  %448 = vmatprep.subr.mxu0 0.0
  %449 = vmatpush1.msra.mxu0 0.0
  %450 = vmatprep.subr.mxu0 0.0
  %451 = vmatpush1.msra.mxu0 0.0
  %452 = vmatprep.mubr.f32.mxu0 0.0
  %453 = vmatmul.mubr.f32.gmra.mrb[0].mxu0 %v371
  %v454 = vpop.f32.mrb[0].mxu0
  %v455 = vadd.f32 0.0, %v454
  %v456 = vpop.f32.mrb[0].mxu0
  %457 = vdwg.mxu0
  %458 = vmatprep.subr.mxu0 0.0
  %459 = vmatpush1.msra.mxu0 %v324
  %460 = vmatprep.subr.mxu0 0.0
  %461 = vmatpush1.msra.mxu0 %v325
  %462 = vmatprep.subr.mxu0 0.0
  %463 = vmatpush1.msra.mxu0 %v326
  %464 = vmatprep.subr.mxu0 0.0
  %465 = vmatpush1.msra.mxu0 %v327
  %466 = vmatprep.subr.mxu0 0.0
  %467 = vmatpush1.msra.mxu0 %v328
  %468 = vmatprep.subr.mxu0 0.0
  %469 = vmatpush1.msra.mxu0 %v329
  %470 = vmatprep.subr.mxu0 0.0
  %471 = vmatpush1.msra.mxu0 %v330
  %472 = vmatprep.subr.mxu0 0.0
  %473 = vmatpush1.msra.mxu0 %v331
  %474 = vmatprep.subr.mxu0 0.0
  %475 = vmatpush1.msra.mxu0 %v332
  %476 = vmatprep.subr.mxu0 0.0
  %477 = vmatpush1.msra.mxu0 %v333
  %478 = vmatprep.subr.mxu0 0.0
  %479 = vmatpush1.msra.mxu0 %v334
  %480 = vmatprep.subr.mxu0 0.0
  %481 = vmatpush1.msra.mxu0 %v335
  %482 = vmatprep.subr.mxu0 0.0
  %483 = vmatpush1.msra.mxu0 %v336
  %484 = vmatprep.subr.mxu0 0.0
  %485 = vmatpush1.msra.mxu0 %v337
  %486 = vmatprep.subr.mxu0 0.0
  %487 = vmatpush1.msra.mxu0 %v338
  %488 = vmatprep.subr.mxu0 0.0
  %489 = vmatpush1.msra.mxu0 %v339
  %490 = vmatprep.subr.mxu0 0.0
  %491 = vmatpush1.msra.mxu0 0.0
  %492 = vmatprep.subr.mxu0 0.0
  %493 = vmatpush1.msra.mxu0 0.0
  %494 = vmatprep.subr.mxu0 0.0
  %495 = vmatpush1.msra.mxu0 0.0
  %496 = vmatprep.subr.mxu0 0.0
  %497 = vmatpush1.msra.mxu0 0.0
  %498 = vmatprep.subr.mxu0 0.0
  %499 = vmatpush1.msra.mxu0 0.0
  %500 = vmatprep.subr.mxu0 0.0
  %501 = vmatpush1.msra.mxu0 0.0
  %502 = vmatprep.subr.mxu0 0.0
  %503 = vmatpush1.msra.mxu0 0.0
  %504 = vmatprep.subr.mxu0 0.0
  %505 = vmatpush1.msra.mxu0 0.0
  %506 = vmatprep.subr.mxu0 0.0
  %507 = vmatpush1.msra.mxu0 0.0
  %508 = vmatprep.subr.mxu0 0.0
  %509 = vmatpush1.msra.mxu0 0.0
  %510 = vmatprep.subr.mxu0 0.0
  %511 = vmatpush1.msra.mxu0 0.0
  %512 = vmatprep.subr.mxu0 0.0
  %513 = vmatpush1.msra.mxu0 0.0
  %514 = vmatprep.subr.mxu0 0.0
  %515 = vmatpush1.msra.mxu0 0.0
  %516 = vmatprep.subr.mxu0 0.0
  %517 = vmatpush1.msra.mxu0 0.0
  %518 = vmatprep.subr.mxu0 0.0
  %519 = vmatpush1.msra.mxu0 0.0
  %520 = vmatprep.subr.mxu0 0.0
  %521 = vmatpush1.msra.mxu0 0.0
  %522 = vmatprep.mubr.f32.mxu0 0.0
  %523 = vmatmul.mubr.f32.gmra.mrb[0].mxu0 %v371
  %v524 = vpop.f32.mrb[0].mxu0
  %v525 = vadd.f32 0.0, %v524
  %v526 = vpop.f32.mrb[0].mxu0
  %527 = vdwg.mxu0
  %v528 = vlaneseq
  %v529 = vshrl.u32 %v528, 7
  %v530 = vsub.s32 1, %v529
  %v531 = vrot.slane %v223, %v530
  %v532 = vmul.f32 %v311, %v531
  %v533 = vlaneseq
  %v534 = vshrl.u32 %v533, 7
  %v535 = vsub.s32 1, %v534
  %v536 = vrot.slane %v224, %v535
  %v537 = vmul.f32 %v316, %v536
  %v539 = vrot.slane %v537, 6
  %v541 = vadd.f32 %v532, %v539
  %v542 = vlaneseq
  %v543 = vshrl.u32 %v542, 7
  %v544 = vsub.s32 1, %v543
  %v545 = vrot.slane %v225, %v544
  %v546 = vmul.f32 %v316, %v545
  %v547 = vmul.f32 %v321, %v545
  %vm550 = vcmask 1043456
  %v551 = vrot.slane %v546, 4
  %v552 = vrot.slane %v547, 4
  %v553 = vsel %vm550, %v551, %v552
  %v555 = vadd.f32 %v541, %v553
  %v556 = vadd.f32 %v555, %v369
  %s557 = scalar_lea.vmem %s5, 128
  %v558 = vld [vmem:[%s557] sm:$0xff]
  %v559 = vld [vmem:[%s557 + $0x8] sm:$0xff]
  %v560 = vld [vmem:[%s557 + $0x10] sm:$0xff]
  %v561 = vld [vmem:[%s557 + $0x18] sm:$0xff]
  %v562 = vld [vmem:[%s557 + $0x20] sm:$0xff]
  %v563 = vld [vmem:[%s557 + $0x28] sm:$0xff]
  %v564 = vld [vmem:[%s557 + $0x30] sm:$0xff]
  %v565 = vld [vmem:[%s557 + $0x38] sm:$0xff]
  %v566 = vld [vmem:[%s557 + $0x40] sm:$0xff]
  %v567 = vld [vmem:[%s557 + $0x48] sm:$0xff]
  %v568 = vld [vmem:[%s557 + $0x50] sm:$0xff]
  %v569 = vld [vmem:[%s557 + $0x58] sm:$0xff]
  %v570 = vld [vmem:[%s557 + $0x60] sm:$0xff]
  %v571 = vld [vmem:[%s557 + $0x68] sm:$0xff]
  %v572 = vld [vmem:[%s557 + $0x70] sm:$0xff]
  %v573 = vld [vmem:[%s557 + $0x78] sm:$0xff]
  %v575 = vrot.slane %v556, 3
  %577 = vmatprep.subr.mxu0 0.0
  %578 = vmatpush1.msra.mxu0 %v558
  %579 = vmatprep.subr.mxu0 0.0
  %580 = vmatpush1.msra.mxu0 %v559
  %581 = vmatprep.subr.mxu0 0.0
  %582 = vmatpush1.msra.mxu0 %v560
  %583 = vmatprep.subr.mxu0 0.0
  %584 = vmatpush1.msra.mxu0 %v561
  %585 = vmatprep.subr.mxu0 0.0
  %586 = vmatpush1.msra.mxu0 %v562
  %587 = vmatprep.subr.mxu0 0.0
  %588 = vmatpush1.msra.mxu0 %v563
  %589 = vmatprep.subr.mxu0 0.0
  %590 = vmatpush1.msra.mxu0 %v564
  %591 = vmatprep.subr.mxu0 0.0
  %592 = vmatpush1.msra.mxu0 %v565
  %593 = vmatprep.subr.mxu0 0.0
  %594 = vmatpush1.msra.mxu0 %v566
  %595 = vmatprep.subr.mxu0 0.0
  %596 = vmatpush1.msra.mxu0 %v567
  %597 = vmatprep.subr.mxu0 0.0
  %598 = vmatpush1.msra.mxu0 %v568
  %599 = vmatprep.subr.mxu0 0.0
  %600 = vmatpush1.msra.mxu0 %v569
  %601 = vmatprep.subr.mxu0 0.0
  %602 = vmatpush1.msra.mxu0 %v570
  %603 = vmatprep.subr.mxu0 0.0
  %604 = vmatpush1.msra.mxu0 %v571
  %605 = vmatprep.subr.mxu0 0.0
  %606 = vmatpush1.msra.mxu0 %v572
  %607 = vmatprep.subr.mxu0 0.0
  %608 = vmatpush1.msra.mxu0 %v573
  %609 = vmatprep.subr.mxu0 0.0
  %610 = vmatpush1.msra.mxu0 0.0
  %611 = vmatprep.subr.mxu0 0.0
  %612 = vmatpush1.msra.mxu0 0.0
  %613 = vmatprep.subr.mxu0 0.0
  %614 = vmatpush1.msra.mxu0 0.0
  %615 = vmatprep.subr.mxu0 0.0
  %616 = vmatpush1.msra.mxu0 0.0
  %617 = vmatprep.subr.mxu0 0.0
  %618 = vmatpush1.msra.mxu0 0.0
  %619 = vmatprep.subr.mxu0 0.0
  %620 = vmatpush1.msra.mxu0 0.0
  %621 = vmatprep.subr.mxu0 0.0
  %622 = vmatpush1.msra.mxu0 0.0
  %623 = vmatprep.subr.mxu0 0.0
  %624 = vmatpush1.msra.mxu0 0.0
  %625 = vmatprep.subr.mxu0 0.0
  %626 = vmatpush1.msra.mxu0 0.0
  %627 = vmatprep.subr.mxu0 0.0
  %628 = vmatpush1.msra.mxu0 0.0
  %629 = vmatprep.subr.mxu0 0.0
  %630 = vmatpush1.msra.mxu0 0.0
  %631 = vmatprep.subr.mxu0 0.0
  %632 = vmatpush1.msra.mxu0 0.0
  %633 = vmatprep.subr.mxu0 0.0
  %634 = vmatpush1.msra.mxu0 0.0
  %635 = vmatprep.subr.mxu0 0.0
  %636 = vmatpush1.msra.mxu0 0.0
  %637 = vmatprep.subr.mxu0 0.0
  %638 = vmatpush1.msra.mxu0 0.0
  %639 = vmatprep.subr.mxu0 0.0
  %640 = vmatpush1.msra.mxu0 0.0
  %641 = vmatprep.mubr.f32.mxu0 0.0
  %642 = vmatmul.mubr.f32.gmra.mrb[0].mxu0 %v575
  %v643 = vpop.f32.mrb[0].mxu0
  %v644 = vadd.f32 0.0, %v643
  %v645 = vpop.f32.mrb[0].mxu0
  %646 = vdwg.mxu0
  %647 = vmatprep.subr.mxu0 0.0
  %648 = vmatpush1.msra.mxu0 %v324
  %649 = vmatprep.subr.mxu0 0.0
  %650 = vmatpush1.msra.mxu0 %v325
  %651 = vmatprep.subr.mxu0 0.0
  %652 = vmatpush1.msra.mxu0 %v326
  %653 = vmatprep.subr.mxu0 0.0
  %654 = vmatpush1.msra.mxu0 %v327
  %655 = vmatprep.subr.mxu0 0.0
  %656 = vmatpush1.msra.mxu0 %v328
  %657 = vmatprep.subr.mxu0 0.0
  %658 = vmatpush1.msra.mxu0 %v329
  %659 = vmatprep.subr.mxu0 0.0
  %660 = vmatpush1.msra.mxu0 %v330
  %661 = vmatprep.subr.mxu0 0.0
  %662 = vmatpush1.msra.mxu0 %v331
  %663 = vmatprep.subr.mxu0 0.0
  %664 = vmatpush1.msra.mxu0 %v332
  %665 = vmatprep.subr.mxu0 0.0
  %666 = vmatpush1.msra.mxu0 %v333
  %667 = vmatprep.subr.mxu0 0.0
  %668 = vmatpush1.msra.mxu0 %v334
  %669 = vmatprep.subr.mxu0 0.0
  %670 = vmatpush1.msra.mxu0 %v335
  %671 = vmatprep.subr.mxu0 0.0
  %672 = vmatpush1.msra.mxu0 %v336
  %673 = vmatprep.subr.mxu0 0.0
  %674 = vmatpush1.msra.mxu0 %v337
  %675 = vmatprep.subr.mxu0 0.0
  %676 = vmatpush1.msra.mxu0 %v338
  %677 = vmatprep.subr.mxu0 0.0
  %678 = vmatpush1.msra.mxu0 %v339
  %679 = vmatprep.subr.mxu0 0.0
  %680 = vmatpush1.msra.mxu0 0.0
  %681 = vmatprep.subr.mxu0 0.0
  %682 = vmatpush1.msra.mxu0 0.0
  %683 = vmatprep.subr.mxu0 0.0
  %684 = vmatpush1.msra.mxu0 0.0
  %685 = vmatprep.subr.mxu0 0.0
  %686 = vmatpush1.msra.mxu0 0.0
  %687 = vmatprep.subr.mxu0 0.0
  %688 = vmatpush1.msra.mxu0 0.0
  %689 = vmatprep.subr.mxu0 0.0
  %690 = vmatpush1.msra.mxu0 0.0
  %691 = vmatprep.subr.mxu0 0.0
  %692 = vmatpush1.msra.mxu0 0.0
  %693 = vmatprep.subr.mxu0 0.0
  %694 = vmatpush1.msra.mxu0 0.0
  %695 = vmatprep.subr.mxu0 0.0
  %696 = vmatpush1.msra.mxu0 0.0
  %697 = vmatprep.subr.mxu0 0.0
  %698 = vmatpush1.msra.mxu0 0.0
  %699 = vmatprep.subr.mxu0 0.0
  %700 = vmatpush1.msra.mxu0 0.0
  %701 = vmatprep.subr.mxu0 0.0
  %702 = vmatpush1.msra.mxu0 0.0
  %703 = vmatprep.subr.mxu0 0.0
  %704 = vmatpush1.msra.mxu0 0.0
  %705 = vmatprep.subr.mxu0 0.0
  %706 = vmatpush1.msra.mxu0 0.0
  %707 = vmatprep.subr.mxu0 0.0
  %708 = vmatpush1.msra.mxu0 0.0
  %709 = vmatprep.subr.mxu0 0.0
  %710 = vmatpush1.msra.mxu0 0.0
  %711 = vmatprep.mubr.f32.mxu0 0.0
  %712 = vmatmul.mubr.f32.gmra.mrb[0].mxu0 %v575
  %v713 = vpop.f32.mrb[0].mxu0
  %v714 = vadd.f32 0.0, %v713
  %v715 = vpop.f32.mrb[0].mxu0
  %716 = vdwg.mxu0
  %v717 = vsel %vm56, %v371, %v556
  %718 = vst [vmem:[%s7] sm:$0x3f] %v717
  %v720 = vrot.slane %v644, 5
  %v722 = vsel %vm56, %v455, %v720
  %vm723 = vcmask 95232
  %724 = vst.msk [vmem:[%s8] sm:$0x3f] %vm723, %v722
  %v726 = vrot.slane %v714, 5
  %v728 = vsel %vm56, %v525, %v726
  %729 = vst.msk [vmem:[%s9] sm:$0x3f] %vm723, %v728
  // Predicated region
  $region30: #{flame_forward.1} parent=0 // pred_check
    _
  $region31: #{flame_forward.1} parent=0 // pred_check_branch
    %731 = sbr.rel (0) target = $region33
  $region32: #{flame_forward.1} parent=0 // pred_region
    _
  $region33: #{flame_forward.1} parent=0 // pred_fallthru
    _
  // Predicated region
  $region34: #{flame_forward.1} parent=0 // pred_check
    _
  $region35: #{flame_forward.1} parent=0 // pred_check_branch
    %733 = sbr.rel (0) target = $region37
  $region36: #{flame_forward.1} parent=0 // pred_region
    _
  $region37: #{flame_forward.1} parent=0 // pred_fallthru
    _
  // Predicated region
  $region38: #{flame_forward.1} parent=0 // pred_check
    _
  $region39: #{flame_forward.1} parent=0 // pred_check_branch
    %735 = sbr.rel (0) target = $region41
  $region40: #{flame_forward.1} parent=0 // pred_region
    _
  $region41: #{flame_forward.1} parent=0 // pred_fallthru
    _
  // Predicated region
  $region42: #{flame_forward.1} parent=0 // pred_check
    _
  $region43: #{flame_forward.1} parent=0 // pred_check_branch
    %737 = sbr.rel (0) target = $region45
  $region44: #{flame_forward.1} parent=0 // pred_region
    _
  $region45: #{flame_forward.1} parent=0 // pred_fallthru
    _
  // Predicated region
  $region46: #{flame_forward.1} parent=0 // pred_check
    _
  $region47: #{flame_forward.1} parent=0 // pred_check_branch
    %739 = sbr.rel (0) target = $region49
  $region48: #{flame_forward.1} parent=0 // pred_region
    _
  $region49: #{flame_forward.1} parent=0 // pred_fallthru
    _
  // Predicated region
  $region50: #{flame_forward.1} parent=0 // pred_check
    _
  $region51: #{flame_forward.1} parent=0 // pred_check_branch
    %741 = sbr.rel (0) target = $region53
  $region52: #{flame_forward.1} parent=0 // pred_region
    _
  $region53: #{flame_forward.1} parent=0 // pred_fallthru
    _

</llo_original>
